<compile_context>
chip_gen: v7x
topology: tpu7x:2x2x1
jax: 0.10.0
libtpu: 0.0.40
codegen_flags: <defaults>
</compile_context>

<pallas_src>
import jax
import jax.numpy as jnp
from jax.experimental import pallas as pl
from jax.experimental.pallas import tpu as pltpu

H1 = 256
H2 = 512
LANE = 128


def _round_up(n, m):
    return -(-n // m) * m


def encoder_kernel(x_ref, w1_ref, b1_ref, w2_ref, b2_ref, w3_ref, b3_ref, o_ref):
    # x_ref: (TM, F_in_pad) bf16      w1: (F_in_pad, 256) bf16   b1: (1, 256) f32
    # w2:    (256, 512)     bf16      b2: (1, 512) f32
    # w3:    (512, F_out_pad) bf16    b3: (1, F_out_pad) f32
    # o_ref: (TM, F_out_pad) f32
    x = x_ref[...]

    h1 = jnp.dot(x, w1_ref[...], preferred_element_type=jnp.float32) + b1_ref[...]
    h1 = jnp.maximum(h1, 0.0).astype(jnp.bfloat16)

    h2 = jnp.dot(h1, w2_ref[...], preferred_element_type=jnp.float32) + b2_ref[...]
    h2 = jnp.maximum(h2, 0.0).astype(jnp.bfloat16)

    h3 = jnp.dot(h2, w3_ref[...], preferred_element_type=jnp.float32) + b3_ref[...]
    h3 = jnp.maximum(h3, 0.0)

    o_ref[...] = h3.astype(o_ref.dtype)


def init_encoder_params(key, in_channels, out_features):
    """PyTorch-default-like init at the true (unpadded) shapes, f32.

    Weights stored pre-transposed as (in_features, out_features) so the kernel
    computes x @ W + b == PyTorch's x @ W_pt.T + b.
    """
    f_in = in_channels * 3 * 3
    dims = [(f_in, H1), (H1, H2), (H2, out_features)]
    params = []
    for fi, fo in dims:
        kw, kb, key = jax.random.split(key, 3)
        bound = 1.0 / (fi ** 0.5)
        w = jax.random.uniform(kw, (fi, fo), jnp.float32, -bound, bound)
        b = jax.random.uniform(kb, (1, fo), jnp.float32, -bound, bound)
        params += [w, b]
    return tuple(params)


def pack_params(params, f_in_pad, f_out_pad):
    """Zero-pad ragged dims to lane width and cast weights to bf16 (one-time)."""
    w1, b1, w2, b2, w3, b3 = params
    w1p = jnp.pad(w1, ((0, f_in_pad - w1.shape[0]), (0, 0))).astype(jnp.bfloat16)
    w2p = w2.astype(jnp.bfloat16)
    w3p = jnp.pad(w3, ((0, 0), (0, f_out_pad - w3.shape[1]))).astype(jnp.bfloat16)
    b3p = jnp.pad(b3, ((0, 0), (0, f_out_pad - b3.shape[1])))  # stays f32
    return w1p, b1, w2p, b2, w3p, b3p


def encoder_forward(x, packed_params, out_features):
    """x: (B, C, 3, 3) float32 NCHW. Returns (B, out_features) float32."""
    w1, b1, w2, b2, w3, b3 = packed_params
    B = x.shape[0]
    f_in = x.shape[1] * x.shape[2] * x.shape[3]
    f_in_pad = w1.shape[0]
    f_out_pad = w3.shape[1]

    # Glue: nn.Flatten (row-major over C,H,W — same as PyTorch), zero-pad K to
    # lane width, bf16 cast for the MXU.
    x_flat = x.reshape(B, f_in).astype(jnp.float32)
    x_flat = jnp.pad(x_flat, ((0, 0), (0, f_in_pad - f_in)))

    # Batch tile matched to MXU M (256 on v6e/v7x); round small batches to 8.
    TM = 256 if B >= 256 else _round_up(B, 8)
    B_pad = _round_up(B, TM)
    if B_pad != B:
        x_flat = jnp.pad(x_flat, ((0, B_pad - B), (0, 0)))
    x_bf16 = x_flat.astype(jnp.bfloat16)

    grid = (B_pad // TM,)

    flops = 2 * B_pad * (f_in_pad * H1 + H1 * H2 + H2 * f_out_pad)
    bytes_accessed = (
        x_bf16.size * 2
        + (w1.size + w2.size + w3.size) * 2
        + (b1.size + b2.size + b3.size) * 4
        + B_pad * f_out_pad * 4
    )

    out_padded = pl.pallas_call(
        encoder_kernel,
        out_shape=jax.ShapeDtypeStruct((B_pad, f_out_pad), jnp.float32),
        grid=grid,
        in_specs=[
            # Batch-tiled activation stream (double-buffered by the pipeline).
            pl.BlockSpec((TM, f_in_pad), lambda i: (i, 0)),
            # Weights / biases: constant block index -> fetched once, resident.
            pl.BlockSpec((f_in_pad, H1), lambda i: (0, 0)),
            pl.BlockSpec((1, H1), lambda i: (0, 0)),
            pl.BlockSpec((H1, H2), lambda i: (0, 0)),
            pl.BlockSpec((1, H2), lambda i: (0, 0)),
            pl.BlockSpec((H2, f_out_pad), lambda i: (0, 0)),
            pl.BlockSpec((1, f_out_pad), lambda i: (0, 0)),
        ],
        out_specs=pl.BlockSpec((TM, f_out_pad), lambda i: (i, 0)),
        compiler_params=pltpu.CompilerParams(
            dimension_semantics=("parallel",),
        ),
        cost_estimate=pl.CostEstimate(
            flops=flops, transcendentals=0, bytes_accessed=bytes_accessed
        ),
    )(x_bf16, w1, b1, w2, b2, w3, b3)

    # Drop batch padding rows and lane-padding output columns.
    return out_padded[:B, :out_features]


if __name__ == "__main__":
    in_channels = 4
    out_features = 32
    batch = 2

    key = jax.random.PRNGKey(0)
    kx, kp = jax.random.split(key)

    # Input implied by the module: (B, in_channels, 3, 3), NCHW.
    x = jax.random.normal(kx, (batch, in_channels, 3, 3), dtype=jnp.float32)

    f_in = in_channels * 3 * 3
    f_in_pad = _round_up(max(f_in, LANE), LANE)
    f_out_pad = _round_up(max(out_features, LANE), LANE)

    params = init_encoder_params(kp, in_channels, out_features)
    packed = pack_params(params, f_in_pad, f_out_pad)

    out = encoder_forward(x, packed, out_features)
    out = jax.block_until_ready(out)

    assert out.shape == (batch, out_features), out.shape
    assert out.dtype == jnp.float32
    # ReLU output must be non-negative.
    assert bool(jnp.all(out >= 0.0))

    print("KERNEL_OK")
</pallas_src>

<mosaic_0001>
module attributes {stable_mosaic.version = 11 : i64} {
  func.func @encoder_kernel(%arg0: i32, %arg1: memref<8x128xbf16, #tpu.memory_space<vmem>>, %arg2: memref<128x256xbf16, #tpu.memory_space<vmem>>, %arg3: memref<1x256xf32, #tpu.memory_space<vmem>>, %arg4: memref<256x512xbf16, #tpu.memory_space<vmem>>, %arg5: memref<1x512xf32, #tpu.memory_space<vmem>>, %arg6: memref<512x128xbf16, #tpu.memory_space<vmem>>, %arg7: memref<1x128xf32, #tpu.memory_space<vmem>>, %arg8: memref<8x128xf32, #tpu.memory_space<vmem>>) attributes {dimension_semantics = [#tpu.dimension_semantics<parallel>], iteration_bounds = array<i64: 1>, scalar_prefetch = 0 : i64, scratch_operands = 0 : i64, tpu.core_type = #tpu.core_type<tc>, window_params = [{transform_indices = @transform_0, window_bounds = array<i64: 8, 128>}, {pipeline_mode = #tpu.pipeline_mode<synchronous>, transform_indices = @transform_1, window_bounds = array<i64: 128, 256>}, {pipeline_mode = #tpu.pipeline_mode<synchronous>, transform_indices = @transform_2, window_bounds = array<i64: 1, 256>}, {pipeline_mode = #tpu.pipeline_mode<synchronous>, transform_indices = @transform_3, window_bounds = array<i64: 256, 512>}, {pipeline_mode = #tpu.pipeline_mode<synchronous>, transform_indices = @transform_4, window_bounds = array<i64: 1, 512>}, {pipeline_mode = #tpu.pipeline_mode<synchronous>, transform_indices = @transform_5, window_bounds = array<i64: 512, 128>}, {pipeline_mode = #tpu.pipeline_mode<synchronous>, transform_indices = @transform_6, window_bounds = array<i64: 1, 128>}, {transform_indices = @transform_7, window_bounds = array<i64: 8, 128>}]} {
    %c0 = arith.constant 0 : index
    %c0_0 = arith.constant 0 : index
    %0 = vector.load %arg1[%c0, %c0_0] : memref<8x128xbf16, #tpu.memory_space<vmem>>, vector<8x128xbf16>
    %c0_1 = arith.constant 0 : index
    %c0_2 = arith.constant 0 : index
    %1 = vector.load %arg2[%c0_1, %c0_2] : memref<128x256xbf16, #tpu.memory_space<vmem>>, vector<128x256xbf16>
    %cst = arith.constant dense<0.000000e+00> : vector<8x256xf32>
    %2 = tpu.matmul %0, %1, %cst {dimension_numbers = #tpu.dot_dimension_numbers<[1], [0], [0], [1], [0, 0, 1, 1], [], []>} : vector<8x128xbf16>, vector<128x256xbf16>, vector<8x256xf32> -> vector<8x256xf32>
    %c0_3 = arith.constant 0 : index
    %c0_4 = arith.constant 0 : index
    %3 = vector.load %arg3[%c0_3, %c0_4] : memref<1x256xf32, #tpu.memory_space<vmem>>, vector<1x256xf32>
    %4 = vector.broadcast %3 : vector<1x256xf32> to vector<8x256xf32>
    %5 = arith.addf %2, %4 : vector<8x256xf32>
    %cst_5 = arith.constant 0.000000e+00 : f32
    %6 = vector.broadcast %cst_5 : f32 to vector<8x256xf32>
    %7 = arith.maximumf %5, %6 : vector<8x256xf32>
    %8 = arith.truncf %7 : vector<8x256xf32> to vector<8x256xbf16>
    %c0_6 = arith.constant 0 : index
    %c0_7 = arith.constant 0 : index
    %9 = vector.load %arg4[%c0_6, %c0_7] : memref<256x512xbf16, #tpu.memory_space<vmem>>, vector<256x512xbf16>
    %cst_8 = arith.constant dense<0.000000e+00> : vector<8x512xf32>
    %10 = tpu.matmul %8, %9, %cst_8 {dimension_numbers = #tpu.dot_dimension_numbers<[1], [0], [0], [1], [0, 0, 1, 1], [], []>} : vector<8x256xbf16>, vector<256x512xbf16>, vector<8x512xf32> -> vector<8x512xf32>
    %c0_9 = arith.constant 0 : index
    %c0_10 = arith.constant 0 : index
    %11 = vector.load %arg5[%c0_9, %c0_10] : memref<1x512xf32, #tpu.memory_space<vmem>>, vector<1x512xf32>
    %12 = vector.broadcast %11 : vector<1x512xf32> to vector<8x512xf32>
    %13 = arith.addf %10, %12 : vector<8x512xf32>
    %cst_11 = arith.constant 0.000000e+00 : f32
    %14 = vector.broadcast %cst_11 : f32 to vector<8x512xf32>
    %15 = arith.maximumf %13, %14 : vector<8x512xf32>
    %16 = arith.truncf %15 : vector<8x512xf32> to vector<8x512xbf16>
    %c0_12 = arith.constant 0 : index
    %c0_13 = arith.constant 0 : index
    %17 = vector.load %arg6[%c0_12, %c0_13] : memref<512x128xbf16, #tpu.memory_space<vmem>>, vector<512x128xbf16>
    %cst_14 = arith.constant dense<0.000000e+00> : vector<8x128xf32>
    %18 = tpu.matmul %16, %17, %cst_14 {dimension_numbers = #tpu.dot_dimension_numbers<[1], [0], [0], [1], [0, 0, 1, 1], [], []>} : vector<8x512xbf16>, vector<512x128xbf16>, vector<8x128xf32> -> vector<8x128xf32>
    %c0_15 = arith.constant 0 : index
    %c0_16 = arith.constant 0 : index
    %19 = vector.load %arg7[%c0_15, %c0_16] : memref<1x128xf32, #tpu.memory_space<vmem>>, vector<1x128xf32>
    %20 = vector.broadcast %19 : vector<1x128xf32> to vector<8x128xf32>
    %21 = arith.addf %18, %20 : vector<8x128xf32>
    %cst_17 = arith.constant 0.000000e+00 : f32
    %22 = vector.broadcast %cst_17 : f32 to vector<8x128xf32>
    %23 = arith.maximumf %21, %22 : vector<8x128xf32>
    %c0_18 = arith.constant 0 : index
    %c0_19 = arith.constant 0 : index
    %24 = vector.load %arg8[%c0_18, %c0_19] : memref<8x128xf32, #tpu.memory_space<vmem>>, vector<8x128xf32>
    tpu.vector_store %arg8[%c0_18, %c0_19], %23 {strides = array<i32>} : memref<8x128xf32, #tpu.memory_space<vmem>>, vector<8x128xf32>,
    return
  }
  func.func @transform_0(%arg0: i32) -> (i32, i32) {
    %c0_i32 = arith.constant 0 : i32
    %c0_i32_0 = arith.constant 0 : i32
    return %arg0, %c0_i32 : i32, i32
  }
  func.func @transform_1(%arg0: i32) -> (i32, i32) {
    %c0_i32 = arith.constant 0 : i32
    %c0_i32_0 = arith.constant 0 : i32
    %c0_i32_1 = arith.constant 0 : i32
    return %c0_i32, %c0_i32_0 : i32, i32
  }
  func.func @transform_2(%arg0: i32) -> (i32, i32) {
    %c0_i32 = arith.constant 0 : i32
    %c0_i32_0 = arith.constant 0 : i32
    %c0_i32_1 = arith.constant 0 : i32
    return %c0_i32, %c0_i32_0 : i32, i32
  }
  func.func @transform_3(%arg0: i32) -> (i32, i32) {
    %c0_i32 = arith.constant 0 : i32
    %c0_i32_0 = arith.constant 0 : i32
    %c0_i32_1 = arith.constant 0 : i32
    return %c0_i32, %c0_i32_0 : i32, i32
  }
  func.func @transform_4(%arg0: i32) -> (i32, i32) {
    %c0_i32 = arith.constant 0 : i32
    %c0_i32_0 = arith.constant 0 : i32
    %c0_i32_1 = arith.constant 0 : i32
    return %c0_i32, %c0_i32_0 : i32, i32
  }
  func.func @transform_5(%arg0: i32) -> (i32, i32) {
    %c0_i32 = arith.constant 0 : i32
    %c0_i32_0 = arith.constant 0 : i32
    %c0_i32_1 = arith.constant 0 : i32
    return %c0_i32, %c0_i32_0 : i32, i32
  }
  func.func @transform_6(%arg0: i32) -> (i32, i32) {
    %c0_i32 = arith.constant 0 : i32
    %c0_i32_0 = arith.constant 0 : i32
    %c0_i32_1 = arith.constant 0 : i32
    return %c0_i32, %c0_i32_0 : i32, i32
  }
  func.func @transform_7(%arg0: i32) -> (i32, i32) {
    %c0_i32 = arith.constant 0 : i32
    %c0_i32_0 = arith.constant 0 : i32
    return %arg0, %c0_i32 : i32, i32
  }
}

</mosaic_0001>

<llo_original>
// kernel: tpu_custom_call.1
$region0: #{tpu_custom_call.1}
  #allocation0 [shape = 'u32[]', space=smem, size = 0x4, offset = 0x4, fixed_abs, tag = 'smem constant byte address 0x4 - core index']
  #allocation1 [shape = 'u32[144,128]{1,0:T(1,128)}', space=vmem, size = 0x12000, scoped, tag = 'internal scratch']
  %s0 = inlined_call_operand.hbm [shape: bf16[8,128], index: 0, kind: input, shape index: {}]
  %s1 = inlined_call_operand.hbm [shape: bf16[128,256], index: 1, kind: input, shape index: {}]
  %s2 = inlined_call_operand.vmem [shape: f32[1,256], index: 2, kind: input, shape index: {}]
  %s3 = inlined_call_operand.hbm [shape: bf16[256,512], index: 3, kind: input, shape index: {}]
  %s4 = inlined_call_operand.vmem [shape: f32[1,512], index: 4, kind: input, shape index: {}]
  %s5 = inlined_call_operand.hbm [shape: bf16[512,128], index: 5, kind: input, shape index: {}]
  %s6 = inlined_call_operand.vmem [shape: f32[1,128], index: 6, kind: input, shape index: {}]
  %s7 = inlined_call_operand.hbm [shape: f32[8,128], index: 7, kind: output, shape index: {}]
  %s8 = sld [smem:[#allocation0]]
  $region54: #{tpu_custom_call.1} parent=0
    _
  %s10 = ssub.s32 1, %s8
  %s11 = scalar_select 0, %s10, %s8
  $region1: #{tpu_custom_call.1} parent=0
    #allocation2 [shape = 'u8[2048]{0}', space=vmem, size = 0x800, scoped, tag = 'input window, operand 0, single buffered']
    #allocation3 [shape = 's32[1]{0}', space=sflag, size = 0x4, scoped, tag = 'scoped memory for tpu_custom_call.1']
    #allocation4 [shape = 's32[1]{0}', space=sflag, size = 0x4, scoped, tag = 'scoped memory for tpu_custom_call.1']
    #allocation5 [shape = 'u8[65536]{0}', space=vmem, size = 0x10000, scoped, tag = 'input window, operand 1, single buffered']
    #allocation6 [shape = 's32[1]{0}', space=sflag, size = 0x4, scoped, tag = 'scoped memory for tpu_custom_call.1']
    #allocation7 [shape = 'u8[262144]{0}', space=vmem, size = 0x40000, scoped, tag = 'input window, operand 3, single buffered']
    #allocation8 [shape = 'u8[131072]{0}', space=vmem, size = 0x20000, scoped, tag = 'input window, operand 5, single buffered']
    #allocation9 [shape = 's32[1]{0}', space=sflag, size = 0x4, scoped, tag = 'scoped memory for tpu_custom_call.1']
    #allocation10 [shape = 'u8[4096]{0}', space=vmem, size = 0x1000, scoped, tag = 'output window, operand 0, single buffered']
    %12 = vsyncpa [#allocation3], 0
    %13 = vsyncpa [#allocation6], 0
    %14 = vsyncpa [#allocation9], 0
    %15 = vsyncpa [#allocation4], 0
    // Predicated region
    $region2: #{tpu_custom_call.1} parent=1 // pred_check
      _
    $region3: #{tpu_custom_call.1} parent=1 // pred_check_branch
      %17 = sbr.rel (0) target = $region5
    $region4: #{tpu_custom_call.1} parent=1 // pred_region
      %s19 = ssub.s32 64, 64
      %20 = vsyncadd [#allocation3], %s19
      %s22 = sshll.u32 [#allocation2], 4
      %s23 = int_to_ptr.vmem [resolvable:$true] %s22
      %25 = dma.hbm_to_vmem [thread:$0]  %s0, 64, %s23, [#allocation3]
    $region5: #{tpu_custom_call.1} parent=1 // pred_fallthru
      _
    // Predicated region
    $region6: #{tpu_custom_call.1} parent=1 // pred_check
      _
    $region7: #{tpu_custom_call.1} parent=1 // pred_check_branch
      %27 = sbr.rel (0) target = $region9
    $region8: #{tpu_custom_call.1} parent=1 // pred_region
      %s29 = ssub.s32 2048, 2048
      %30 = vsyncadd [#allocation6], %s29
      %s31 = sshll.u32 [#allocation5], 4
      %s32 = int_to_ptr.vmem [resolvable:$true] %s31
      %37 = dma.hbm_to_vmem [thread:$0]  %s1, 2048, %s32, [#allocation6], 128, 128, 8
    $region9: #{tpu_custom_call.1} parent=1 // pred_fallthru
      _
    // Predicated region
    $region10: #{tpu_custom_call.1} parent=1 // pred_check
      _
    $region11: #{tpu_custom_call.1} parent=1 // pred_check_branch
      %39 = sbr.rel (0) target = $region13
    $region12: #{tpu_custom_call.1} parent=1 // pred_region
      _
    $region13: #{tpu_custom_call.1} parent=1 // pred_fallthru
      _
    // Predicated region
    $region14: #{tpu_custom_call.1} parent=1 // pred_check
      _
    $region15: #{tpu_custom_call.1} parent=1 // pred_check_branch
      %41 = sbr.rel (0) target = $region17
    $region16: #{tpu_custom_call.1} parent=1 // pred_region
      %s43 = ssub.s32 8192, 8192
      %44 = vsyncadd [#allocation6], %s43
      %s45 = sshll.u32 [#allocation7], 4
      %s46 = int_to_ptr.vmem [resolvable:$true] %s45
      %51 = dma.hbm_to_vmem [thread:$0]  %s3, 8192, %s46, [#allocation6], 256, 256, 16
    $region17: #{tpu_custom_call.1} parent=1 // pred_fallthru
      _
    // Predicated region
    $region18: #{tpu_custom_call.1} parent=1 // pred_check
      _
    $region19: #{tpu_custom_call.1} parent=1 // pred_check_branch
      %53 = sbr.rel (0) target = $region21
    $region20: #{tpu_custom_call.1} parent=1 // pred_region
      _
    $region21: #{tpu_custom_call.1} parent=1 // pred_fallthru
      _
    // Predicated region
    $region22: #{tpu_custom_call.1} parent=1 // pred_check
      _
    $region23: #{tpu_custom_call.1} parent=1 // pred_check_branch
      %55 = sbr.rel (0) target = $region25
    $region24: #{tpu_custom_call.1} parent=1 // pred_region
      %s57 = ssub.s32 4096, 4096
      %58 = vsyncadd [#allocation9], %s57
      %s59 = sshll.u32 [#allocation8], 4
      %s60 = int_to_ptr.vmem [resolvable:$true] %s59
      %65 = dma.hbm_to_vmem [thread:$0]  %s5, 4096, %s60, [#allocation9], 64, 64, 4
    $region25: #{tpu_custom_call.1} parent=1 // pred_fallthru
      _
    // Predicated region
    $region26: #{tpu_custom_call.1} parent=1 // pred_check
      _
    $region27: #{tpu_custom_call.1} parent=1 // pred_check_branch
      %67 = sbr.rel (0) target = $region29
    $region28: #{tpu_custom_call.1} parent=1 // pred_region
      _
    $region29: #{tpu_custom_call.1} parent=1 // pred_fallthru
      _
    // Predicated region
    $region30: #{tpu_custom_call.1} parent=1 // pred_check
      _
    $region31: #{tpu_custom_call.1} parent=1 // pred_check_branch
      %69 = sbr.rel (0) target = $region33
    $region32: #{tpu_custom_call.1} parent=1 // pred_region
      %70 = dma.done [#allocation3], 64
    $region33: #{tpu_custom_call.1} parent=1 // pred_fallthru
      _
    // Predicated region
    $region34: #{tpu_custom_call.1} parent=1 // pred_check
      _
    $region35: #{tpu_custom_call.1} parent=1 // pred_check_branch
      %72 = sbr.rel (0) target = $region37
    $region36: #{tpu_custom_call.1} parent=1 // pred_region
      %73 = dma.done [#allocation6], 2048
    $region37: #{tpu_custom_call.1} parent=1 // pred_fallthru
      _
    // Predicated region
    $region38: #{tpu_custom_call.1} parent=1 // pred_check
      _
    $region39: #{tpu_custom_call.1} parent=1 // pred_check_branch
      %75 = sbr.rel (0) target = $region41
    $region40: #{tpu_custom_call.1} parent=1 // pred_region
      %76 = dma.done [#allocation6], 8192
    $region41: #{tpu_custom_call.1} parent=1 // pred_fallthru
      _
    // Predicated region
    $region42: #{tpu_custom_call.1} parent=1 // pred_check
      _
    $region43: #{tpu_custom_call.1} parent=1 // pred_check_branch
      %78 = sbr.rel (0) target = $region45
    $region44: #{tpu_custom_call.1} parent=1 // pred_region
      %79 = dma.done [#allocation9], 4096
    $region45: #{tpu_custom_call.1} parent=1 // pred_fallthru
      _
    %v81 = vld [vmem:[#allocation2] sm:$0xf]
    %v82 = vld [vmem:[#allocation5] sm:$0xff]
    %v83 = vld [vmem:[#allocation5 + $0x8] sm:$0xff]
    %v84 = vld [vmem:[#allocation5 + $0x10] sm:$0xff]
    %v85 = vld [vmem:[#allocation5 + $0x18] sm:$0xff]
    %v86 = vld [vmem:[#allocation5 + $0x20] sm:$0xff]
    %v87 = vld [vmem:[#allocation5 + $0x28] sm:$0xff]
    %v88 = vld [vmem:[#allocation5 + $0x30] sm:$0xff]
    %v89 = vld [vmem:[#allocation5 + $0x38] sm:$0xff]
    %v90 = vld [vmem:[#allocation5 + $0x40] sm:$0xff]
    %v91 = vld [vmem:[#allocation5 + $0x48] sm:$0xff]
    %v92 = vld [vmem:[#allocation5 + $0x50] sm:$0xff]
    %v93 = vld [vmem:[#allocation5 + $0x58] sm:$0xff]
    %v94 = vld [vmem:[#allocation5 + $0x60] sm:$0xff]
    %v95 = vld [vmem:[#allocation5 + $0x68] sm:$0xff]
    %v96 = vld [vmem:[#allocation5 + $0x70] sm:$0xff]
    %v97 = vld [vmem:[#allocation5 + $0x78] sm:$0xff]
    %v98 = vld [vmem:[%s2] sm:$0x3]
    %v100 = vlaneseq
    %v101 = vshrl.u32 %v100, 7
    %v102 = vsub.s32 0, %v101
    %v103 = vrot.slane %v98, %v102
    %v104 = vlaneseq
    %v105 = vshrl.u32 %v104, 7
    %v106 = vsub.s32 1, %v105
    %v107 = vrot.slane %v98, %v106
    %v126 = vunpack.c.l.b16 %v82
    %v127 = vunpack.c.h.b16 %v82
    %v128 = vunpack.c.l.b16 %v83
    %v129 = vunpack.c.h.b16 %v83
    %v130 = vunpack.c.l.b16 %v84
    %v131 = vunpack.c.h.b16 %v84
    %v132 = vunpack.c.l.b16 %v85
    %v133 = vunpack.c.h.b16 %v85
    %v134 = vunpack.c.l.b16 %v86
    %v135 = vunpack.c.h.b16 %v86
    %v136 = vunpack.c.l.b16 %v87
    %v137 = vunpack.c.h.b16 %v87
    %v138 = vunpack.c.l.b16 %v88
    %v139 = vunpack.c.h.b16 %v88
    %v140 = vunpack.c.l.b16 %v89
    %v141 = vunpack.c.h.b16 %v89
    %v142 = vunpack.c.l.b16 %v90
    %v143 = vunpack.c.h.b16 %v90
    %v144 = vunpack.c.l.b16 %v91
    %v145 = vunpack.c.h.b16 %v91
    %v146 = vunpack.c.l.b16 %v92
    %v147 = vunpack.c.h.b16 %v92
    %v148 = vunpack.c.l.b16 %v93
    %v149 = vunpack.c.h.b16 %v93
    %v150 = vunpack.c.l.b16 %v94
    %v151 = vunpack.c.h.b16 %v94
    %v152 = vunpack.c.l.b16 %v95
    %v153 = vunpack.c.h.b16 %v95
    %v154 = vunpack.c.l.b16 %v96
    %v155 = vunpack.c.h.b16 %v96
    %v156 = vunpack.c.l.b16 %v97
    %v157 = vunpack.c.h.b16 %v97
    %v158 = vpack.c.b16 %v128, %v126
    %v159 = vpack.c.b16 %v129, %v127
    %v160 = vpack.c.b16 %v132, %v130
    %v161 = vpack.c.b16 %v133, %v131
    %v162 = vpack.c.b16 %v136, %v134
    %v163 = vpack.c.b16 %v137, %v135
    %v164 = vpack.c.b16 %v140, %v138
    %v165 = vpack.c.b16 %v141, %v139
    %v166 = vpack.c.b16 %v144, %v142
    %v167 = vpack.c.b16 %v145, %v143
    %v168 = vpack.c.b16 %v148, %v146
    %v169 = vpack.c.b16 %v149, %v147
    %v170 = vpack.c.b16 %v152, %v150
    %v171 = vpack.c.b16 %v153, %v151
    %v172 = vpack.c.b16 %v156, %v154
    %v173 = vpack.c.b16 %v157, %v155
    %190 = vmatprep.subr.bf16.mxu0 %v159
    %191 = vmatpush1.bf16.msra.mxu0 %v158
    %192 = vmatprep.subr.bf16.mxu0 %v161
    %193 = vmatpush1.bf16.msra.mxu0 %v160
    %194 = vmatprep.subr.bf16.mxu0 %v163
    %195 = vmatpush1.bf16.msra.mxu0 %v162
    %196 = vmatprep.subr.bf16.mxu0 %v165
    %197 = vmatpush1.bf16.msra.mxu0 %v164
    %198 = vmatprep.subr.bf16.mxu0 %v167
    %199 = vmatpush1.bf16.msra.mxu0 %v166
    %200 = vmatprep.subr.bf16.mxu0 %v169
    %201 = vmatpush1.bf16.msra.mxu0 %v168
    %202 = vmatprep.subr.bf16.mxu0 %v171
    %203 = vmatpush1.bf16.msra.mxu0 %v170
    %204 = vmatprep.subr.bf16.mxu0 %v173
    %205 = vmatpush1.bf16.msra.mxu0 %v172
    %206 = vmatprep.subr.bf16.mxu0 0
    %207 = vmatpush1.bf16.msra.mxu0 0
    %208 = vmatprep.subr.bf16.mxu0 0
    %209 = vmatpush1.bf16.msra.mxu0 0
    %210 = vmatprep.subr.bf16.mxu0 0
    %211 = vmatpush1.bf16.msra.mxu0 0
    %212 = vmatprep.subr.bf16.mxu0 0
    %213 = vmatpush1.bf16.msra.mxu0 0
    %214 = vmatprep.subr.bf16.mxu0 0
    %215 = vmatpush1.bf16.msra.mxu0 0
    %216 = vmatprep.subr.bf16.mxu0 0
    %217 = vmatpush1.bf16.msra.mxu0 0
    %218 = vmatprep.subr.bf16.mxu0 0
    %219 = vmatpush1.bf16.msra.mxu0 0
    %220 = vmatprep.subr.bf16.mxu0 0
    %221 = vmatpush1.bf16.msra.mxu0 0
    %222 = vmatprep.mubr.bf16.mxu0 0
    %223 = vmatmul.mubr.bf16.gmra.mrb[0].mxu0 %v81
    %v224 = vpop.f32.mrb[0].mxu0
    %v225 = vadd.f32 %v103, %v224
    %v226 = vpop.f32.mrb[0].mxu0
    %v227 = vadd.f32 %v107, %v226
    %v228 = vpop.f32.mrb[0].mxu0
    %v229 = vpop.f32.mrb[0].mxu0
    %230 = vdwg.mxu0
    %v231 = vmax.f32 %v225, 0.0
    %v232 = vmax.f32 %v227, 0.0
    %v233 = vpack.c.bf16 %v231, %v231
    %v234 = vpack.c.bf16 %v232, %v232
    %v235 = vld [vmem:[#allocation7] sm:$0xff]
    %v236 = vld [vmem:[#allocation7 + $0x8] sm:$0xff]
    %v237 = vld [vmem:[#allocation7 + $0x10] sm:$0xff]
    %v238 = vld [vmem:[#allocation7 + $0x18] sm:$0xff]
    %v239 = vld [vmem:[#allocation7 + $0x20] sm:$0xff]
    %v240 = vld [vmem:[#allocation7 + $0x28] sm:$0xff]
    %v241 = vld [vmem:[#allocation7 + $0x30] sm:$0xff]
    %v242 = vld [vmem:[#allocation7 + $0x38] sm:$0xff]
    %v243 = vld [vmem:[#allocation7 + $0x40] sm:$0xff]
    %v244 = vld [vmem:[#allocation7 + $0x48] sm:$0xff]
    %v245 = vld [vmem:[#allocation7 + $0x50] sm:$0xff]
    %v246 = vld [vmem:[#allocation7 + $0x58] sm:$0xff]
    %v247 = vld [vmem:[#allocation7 + $0x60] sm:$0xff]
    %v248 = vld [vmem:[#allocation7 + $0x68] sm:$0xff]
    %v249 = vld [vmem:[#allocation7 + $0x70] sm:$0xff]
    %v250 = vld [vmem:[#allocation7 + $0x78] sm:$0xff]
    %v251 = vld [vmem:[#allocation7 + $0x80] sm:$0xff]
    %v252 = vld [vmem:[#allocation7 + $0x88] sm:$0xff]
    %v253 = vld [vmem:[#allocation7 + $0x90] sm:$0xff]
    %v254 = vld [vmem:[#allocation7 + $0x98] sm:$0xff]
    %v255 = vld [vmem:[#allocation7 + $0xa0] sm:$0xff]
    %v256 = vld [vmem:[#allocation7 + $0xa8] sm:$0xff]
    %v257 = vld [vmem:[#allocation7 + $0xb0] sm:$0xff]
    %v258 = vld [vmem:[#allocation7 + $0xb8] sm:$0xff]
    %v259 = vld [vmem:[#allocation7 + $0xc0] sm:$0xff]
    %v260 = vld [vmem:[#allocation7 + $0xc8] sm:$0xff]
    %v261 = vld [vmem:[#allocation7 + $0xd0] sm:$0xff]
    %v262 = vld [vmem:[#allocation7 + $0xd8] sm:$0xff]
    %v263 = vld [vmem:[#allocation7 + $0xe0] sm:$0xff]
    %v264 = vld [vmem:[#allocation7 + $0xe8] sm:$0xff]
    %v265 = vld [vmem:[#allocation7 + $0xf0] sm:$0xff]
    %v266 = vld [vmem:[#allocation7 + $0xf8] sm:$0xff]
    %v267 = vld [vmem:[#allocation7 + $0x100] sm:$0xff]
    %v268 = vld [vmem:[#allocation7 + $0x108] sm:$0xff]
    %v269 = vld [vmem:[#allocation7 + $0x110] sm:$0xff]
    %v270 = vld [vmem:[#allocation7 + $0x118] sm:$0xff]
    %v271 = vld [vmem:[#allocation7 + $0x120] sm:$0xff]
    %v272 = vld [vmem:[#allocation7 + $0x128] sm:$0xff]
    %v273 = vld [vmem:[#allocation7 + $0x130] sm:$0xff]
    %v274 = vld [vmem:[#allocation7 + $0x138] sm:$0xff]
    %v275 = vld [vmem:[#allocation7 + $0x140] sm:$0xff]
    %v276 = vld [vmem:[#allocation7 + $0x148] sm:$0xff]
    %v277 = vld [vmem:[#allocation7 + $0x150] sm:$0xff]
    %v278 = vld [vmem:[#allocation7 + $0x158] sm:$0xff]
    %v279 = vld [vmem:[#allocation7 + $0x160] sm:$0xff]
    %v280 = vld [vmem:[#allocation7 + $0x168] sm:$0xff]
    %v281 = vld [vmem:[#allocation7 + $0x170] sm:$0xff]
    %v282 = vld [vmem:[#allocation7 + $0x178] sm:$0xff]
    %v283 = vld [vmem:[#allocation7 + $0x180] sm:$0xff]
    %v284 = vld [vmem:[#allocation7 + $0x188] sm:$0xff]
    %v285 = vld [vmem:[#allocation7 + $0x190] sm:$0xff]
    %v286 = vld [vmem:[#allocation7 + $0x198] sm:$0xff]
    %v287 = vld [vmem:[#allocation7 + $0x1a0] sm:$0xff]
    %v288 = vld [vmem:[#allocation7 + $0x1a8] sm:$0xff]
    %v289 = vld [vmem:[#allocation7 + $0x1b0] sm:$0xff]
    %v290 = vld [vmem:[#allocation7 + $0x1b8] sm:$0xff]
    %v291 = vld [vmem:[#allocation7 + $0x1c0] sm:$0xff]
    %v292 = vld [vmem:[#allocation7 + $0x1c8] sm:$0xff]
    %v293 = vld [vmem:[#allocation7 + $0x1d0] sm:$0xff]
    %v294 = vld [vmem:[#allocation7 + $0x1d8] sm:$0xff]
    %v295 = vld [vmem:[#allocation7 + $0x1e0] sm:$0xff]
    %v296 = vld [vmem:[#allocation7 + $0x1e8] sm:$0xff]
    %v297 = vld [vmem:[#allocation7 + $0x1f0] sm:$0xff]
    %v298 = vld [vmem:[#allocation7 + $0x1f8] sm:$0xff]
    %v299 = vld [vmem:[%s4] sm:$0xf]
    %v301 = vlaneseq
    %v302 = vshrl.u32 %v301, 7
    %v303 = vsub.s32 0, %v302
    %v304 = vrot.slane %v299, %v303
    %v305 = vlaneseq
    %v306 = vshrl.u32 %v305, 7
    %v307 = vsub.s32 1, %v306
    %v308 = vrot.slane %v299, %v307
    %v309 = vlaneseq
    %v310 = vshrl.u32 %v309, 7
    %v311 = vsub.s32 2, %v310
    %v312 = vrot.slane %v299, %v311
    %v313 = vlaneseq
    %v314 = vshrl.u32 %v313, 7
    %v315 = vsub.s32 3, %v314
    %v316 = vrot.slane %v299, %v315
    %v385 = vunpack.c.l.b16 %v235
    %v386 = vunpack.c.h.b16 %v235
    %v387 = vunpack.c.l.b16 %v236
    %v388 = vunpack.c.h.b16 %v236
    %v389 = vunpack.c.l.b16 %v237
    %v390 = vunpack.c.h.b16 %v237
    %v391 = vunpack.c.l.b16 %v238
    %v392 = vunpack.c.h.b16 %v238
    %v393 = vunpack.c.l.b16 %v239
    %v394 = vunpack.c.h.b16 %v239
    %v395 = vunpack.c.l.b16 %v240
    %v396 = vunpack.c.h.b16 %v240
    %v397 = vunpack.c.l.b16 %v241
    %v398 = vunpack.c.h.b16 %v241
    %v399 = vunpack.c.l.b16 %v242
    %v400 = vunpack.c.h.b16 %v242
    %v401 = vunpack.c.l.b16 %v243
    %v402 = vunpack.c.h.b16 %v243
    %v403 = vunpack.c.l.b16 %v244
    %v404 = vunpack.c.h.b16 %v244
    %v405 = vunpack.c.l.b16 %v245
    %v406 = vunpack.c.h.b16 %v245
    %v407 = vunpack.c.l.b16 %v246
    %v408 = vunpack.c.h.b16 %v246
    %v409 = vunpack.c.l.b16 %v247
    %v410 = vunpack.c.h.b16 %v247
    %v411 = vunpack.c.l.b16 %v248
    %v412 = vunpack.c.h.b16 %v248
    %v413 = vunpack.c.l.b16 %v249
    %v414 = vunpack.c.h.b16 %v249
    %v415 = vunpack.c.l.b16 %v250
    %v416 = vunpack.c.h.b16 %v250
    %v417 = vunpack.c.l.b16 %v251
    %v418 = vunpack.c.h.b16 %v251
    %v419 = vunpack.c.l.b16 %v252
    %v420 = vunpack.c.h.b16 %v252
    %v421 = vunpack.c.l.b16 %v253
    %v422 = vunpack.c.h.b16 %v253
    %v423 = vunpack.c.l.b16 %v254
    %v424 = vunpack.c.h.b16 %v254
    %v425 = vunpack.c.l.b16 %v255
    %v426 = vunpack.c.h.b16 %v255
    %v427 = vunpack.c.l.b16 %v256
    %v428 = vunpack.c.h.b16 %v256
    %v429 = vunpack.c.l.b16 %v257
    %v430 = vunpack.c.h.b16 %v257
    %v431 = vunpack.c.l.b16 %v258
    %v432 = vunpack.c.h.b16 %v258
    %v433 = vunpack.c.l.b16 %v259
    %v434 = vunpack.c.h.b16 %v259
    %v435 = vunpack.c.l.b16 %v260
    %v436 = vunpack.c.h.b16 %v260
    %v437 = vunpack.c.l.b16 %v261
    %v438 = vunpack.c.h.b16 %v261
    %v439 = vunpack.c.l.b16 %v262
    %v440 = vunpack.c.h.b16 %v262
    %v441 = vunpack.c.l.b16 %v263
    %v442 = vunpack.c.h.b16 %v263
    %v443 = vunpack.c.l.b16 %v264
    %v444 = vunpack.c.h.b16 %v264
    %v445 = vunpack.c.l.b16 %v265
    %v446 = vunpack.c.h.b16 %v265
    %v447 = vunpack.c.l.b16 %v266
    %v448 = vunpack.c.h.b16 %v266
    %v449 = vunpack.c.l.b16 %v267
    %v450 = vunpack.c.h.b16 %v267
    %v451 = vunpack.c.l.b16 %v268
    %v452 = vunpack.c.h.b16 %v268
    %v453 = vunpack.c.l.b16 %v269
    %v454 = vunpack.c.h.b16 %v269
    %v455 = vunpack.c.l.b16 %v270
    %v456 = vunpack.c.h.b16 %v270
    %v457 = vunpack.c.l.b16 %v271
    %v458 = vunpack.c.h.b16 %v271
    %v459 = vunpack.c.l.b16 %v272
    %v460 = vunpack.c.h.b16 %v272
    %v461 = vunpack.c.l.b16 %v273
    %v462 = vunpack.c.h.b16 %v273
    %v463 = vunpack.c.l.b16 %v274
    %v464 = vunpack.c.h.b16 %v274
    %v465 = vunpack.c.l.b16 %v275
    %v466 = vunpack.c.h.b16 %v275
    %v467 = vunpack.c.l.b16 %v276
    %v468 = vunpack.c.h.b16 %v276
    %v469 = vunpack.c.l.b16 %v277
    %v470 = vunpack.c.h.b16 %v277
    %v471 = vunpack.c.l.b16 %v278
    %v472 = vunpack.c.h.b16 %v278
    %v473 = vunpack.c.l.b16 %v279
    %v474 = vunpack.c.h.b16 %v279
    %v475 = vunpack.c.l.b16 %v280
    %v476 = vunpack.c.h.b16 %v280
    %v477 = vunpack.c.l.b16 %v281
    %v478 = vunpack.c.h.b16 %v281
    %v479 = vunpack.c.l.b16 %v282
    %v480 = vunpack.c.h.b16 %v282
    %v481 = vunpack.c.l.b16 %v283
    %v482 = vunpack.c.h.b16 %v283
    %v483 = vunpack.c.l.b16 %v284
    %v484 = vunpack.c.h.b16 %v284
    %v485 = vunpack.c.l.b16 %v285
    %v486 = vunpack.c.h.b16 %v285
    %v487 = vunpack.c.l.b16 %v286
    %v488 = vunpack.c.h.b16 %v286
    %v489 = vunpack.c.l.b16 %v287
    %v490 = vunpack.c.h.b16 %v287
    %v491 = vunpack.c.l.b16 %v288
    %v492 = vunpack.c.h.b16 %v288
    %v493 = vunpack.c.l.b16 %v289
    %v494 = vunpack.c.h.b16 %v289
    %v495 = vunpack.c.l.b16 %v290
    %v496 = vunpack.c.h.b16 %v290
    %v497 = vunpack.c.l.b16 %v291
    %v498 = vunpack.c.h.b16 %v291
    %v499 = vunpack.c.l.b16 %v292
    %v500 = vunpack.c.h.b16 %v292
    %v501 = vunpack.c.l.b16 %v293
    %v502 = vunpack.c.h.b16 %v293
    %v503 = vunpack.c.l.b16 %v294
    %v504 = vunpack.c.h.b16 %v294
    %v505 = vunpack.c.l.b16 %v295
    %v506 = vunpack.c.h.b16 %v295
    %v507 = vunpack.c.l.b16 %v296
    %v508 = vunpack.c.h.b16 %v296
    %v509 = vunpack.c.l.b16 %v297
    %v510 = vunpack.c.h.b16 %v297
    %v511 = vunpack.c.l.b16 %v298
    %v512 = vunpack.c.h.b16 %v298
    %v513 = vpack.c.b16 %v389, %v385
    %v514 = vpack.c.b16 %v390, %v386
    %v515 = vpack.c.b16 %v391, %v387
    %v516 = vpack.c.b16 %v392, %v388
    %v517 = vpack.c.b16 %v397, %v393
    %v518 = vpack.c.b16 %v398, %v394
    %v519 = vpack.c.b16 %v399, %v395
    %v520 = vpack.c.b16 %v400, %v396
    %v521 = vpack.c.b16 %v405, %v401
    %v522 = vpack.c.b16 %v406, %v402
    %v523 = vpack.c.b16 %v407, %v403
    %v524 = vpack.c.b16 %v408, %v404
    %v525 = vpack.c.b16 %v413, %v409
    %v526 = vpack.c.b16 %v414, %v410
    %v527 = vpack.c.b16 %v415, %v411
    %v528 = vpack.c.b16 %v416, %v412
    %v529 = vpack.c.b16 %v421, %v417
    %v530 = vpack.c.b16 %v422, %v418
    %v531 = vpack.c.b16 %v423, %v419
    %v532 = vpack.c.b16 %v424, %v420
    %v533 = vpack.c.b16 %v429, %v425
    %v534 = vpack.c.b16 %v430, %v426
    %v535 = vpack.c.b16 %v431, %v427
    %v536 = vpack.c.b16 %v432, %v428
    %v537 = vpack.c.b16 %v437, %v433
    %v538 = vpack.c.b16 %v438, %v434
    %v539 = vpack.c.b16 %v439, %v435
    %v540 = vpack.c.b16 %v440, %v436
    %v541 = vpack.c.b16 %v445, %v441
    %v542 = vpack.c.b16 %v446, %v442
    %v543 = vpack.c.b16 %v447, %v443
    %v544 = vpack.c.b16 %v448, %v444
    %v545 = vpack.c.b16 %v453, %v449
    %v546 = vpack.c.b16 %v454, %v450
    %v547 = vpack.c.b16 %v455, %v451
    %v548 = vpack.c.b16 %v456, %v452
    %v549 = vpack.c.b16 %v461, %v457
    %v550 = vpack.c.b16 %v462, %v458
    %v551 = vpack.c.b16 %v463, %v459
    %v552 = vpack.c.b16 %v464, %v460
    %v553 = vpack.c.b16 %v469, %v465
    %v554 = vpack.c.b16 %v470, %v466
    %v555 = vpack.c.b16 %v471, %v467
    %v556 = vpack.c.b16 %v472, %v468
    %v557 = vpack.c.b16 %v477, %v473
    %v558 = vpack.c.b16 %v478, %v474
    %v559 = vpack.c.b16 %v479, %v475
    %v560 = vpack.c.b16 %v480, %v476
    %v561 = vpack.c.b16 %v485, %v481
    %v562 = vpack.c.b16 %v486, %v482
    %v563 = vpack.c.b16 %v487, %v483
    %v564 = vpack.c.b16 %v488, %v484
    %v565 = vpack.c.b16 %v493, %v489
    %v566 = vpack.c.b16 %v494, %v490
    %v567 = vpack.c.b16 %v495, %v491
    %v568 = vpack.c.b16 %v496, %v492
    %v569 = vpack.c.b16 %v501, %v497
    %v570 = vpack.c.b16 %v502, %v498
    %v571 = vpack.c.b16 %v503, %v499
    %v572 = vpack.c.b16 %v504, %v500
    %v573 = vpack.c.b16 %v509, %v505
    %v574 = vpack.c.b16 %v510, %v506
    %v575 = vpack.c.b16 %v511, %v507
    %v576 = vpack.c.b16 %v512, %v508
    %641 = vmatprep.subr.bf16.mxu0 %v514
    %642 = vmatpush1.bf16.msra.mxu0 %v513
    %643 = vmatprep.subr.bf16.mxu0 %v518
    %644 = vmatpush1.bf16.msra.mxu0 %v517
    %645 = vmatprep.subr.bf16.mxu0 %v522
    %646 = vmatpush1.bf16.msra.mxu0 %v521
    %647 = vmatprep.subr.bf16.mxu0 %v526
    %648 = vmatpush1.bf16.msra.mxu0 %v525
    %649 = vmatprep.subr.bf16.mxu0 %v530
    %650 = vmatpush1.bf16.msra.mxu0 %v529
    %651 = vmatprep.subr.bf16.mxu0 %v534
    %652 = vmatpush1.bf16.msra.mxu0 %v533
    %653 = vmatprep.subr.bf16.mxu0 %v538
    %654 = vmatpush1.bf16.msra.mxu0 %v537
    %655 = vmatprep.subr.bf16.mxu0 %v542
    %656 = vmatpush1.bf16.msra.mxu0 %v541
    %657 = vmatprep.subr.bf16.mxu0 %v546
    %658 = vmatpush1.bf16.msra.mxu0 %v545
    %659 = vmatprep.subr.bf16.mxu0 %v550
    %660 = vmatpush1.bf16.msra.mxu0 %v549
    %661 = vmatprep.subr.bf16.mxu0 %v554
    %662 = vmatpush1.bf16.msra.mxu0 %v553
    %663 = vmatprep.subr.bf16.mxu0 %v558
    %664 = vmatpush1.bf16.msra.mxu0 %v557
    %665 = vmatprep.subr.bf16.mxu0 %v562
    %666 = vmatpush1.bf16.msra.mxu0 %v561
    %667 = vmatprep.subr.bf16.mxu0 %v566
    %668 = vmatpush1.bf16.msra.mxu0 %v565
    %669 = vmatprep.subr.bf16.mxu0 %v570
    %670 = vmatpush1.bf16.msra.mxu0 %v569
    %671 = vmatprep.subr.bf16.mxu0 %v574
    %672 = vmatpush1.bf16.msra.mxu0 %v573
    %673 = vmatprep.mubr.bf16.mxu0 %v234
    %674 = vmatmul.mubr.bf16.gmra.mrb[0].mxu0 %v233
    %v675 = vpop.f32.mrb[0].mxu0
    %v676 = vadd.f32 %v304, %v675
    %v677 = vpop.f32.mrb[0].mxu0
    %v678 = vadd.f32 %v308, %v677
    %v679 = vpop.f32.mrb[0].mxu0
    %v680 = vpop.f32.mrb[0].mxu0
    %681 = vdwg.mxu0
    %682 = vmatprep.subr.bf16.mxu0 %v516
    %683 = vmatpush1.bf16.msra.mxu0 %v515
    %684 = vmatprep.subr.bf16.mxu0 %v520
    %685 = vmatpush1.bf16.msra.mxu0 %v519
    %686 = vmatprep.subr.bf16.mxu0 %v524
    %687 = vmatpush1.bf16.msra.mxu0 %v523
    %688 = vmatprep.subr.bf16.mxu0 %v528
    %689 = vmatpush1.bf16.msra.mxu0 %v527
    %690 = vmatprep.subr.bf16.mxu0 %v532
    %691 = vmatpush1.bf16.msra.mxu0 %v531
    %692 = vmatprep.subr.bf16.mxu0 %v536
    %693 = vmatpush1.bf16.msra.mxu0 %v535
    %694 = vmatprep.subr.bf16.mxu0 %v540
    %695 = vmatpush1.bf16.msra.mxu0 %v539
    %696 = vmatprep.subr.bf16.mxu0 %v544
    %697 = vmatpush1.bf16.msra.mxu0 %v543
    %698 = vmatprep.subr.bf16.mxu0 %v548
    %699 = vmatpush1.bf16.msra.mxu0 %v547
    %700 = vmatprep.subr.bf16.mxu0 %v552
    %701 = vmatpush1.bf16.msra.mxu0 %v551
    %702 = vmatprep.subr.bf16.mxu0 %v556
    %703 = vmatpush1.bf16.msra.mxu0 %v555
    %704 = vmatprep.subr.bf16.mxu0 %v560
    %705 = vmatpush1.bf16.msra.mxu0 %v559
    %706 = vmatprep.subr.bf16.mxu0 %v564
    %707 = vmatpush1.bf16.msra.mxu0 %v563
    %708 = vmatprep.subr.bf16.mxu0 %v568
    %709 = vmatpush1.bf16.msra.mxu0 %v567
    %710 = vmatprep.subr.bf16.mxu0 %v572
    %711 = vmatpush1.bf16.msra.mxu0 %v571
    %712 = vmatprep.subr.bf16.mxu0 %v576
    %713 = vmatpush1.bf16.msra.mxu0 %v575
    %714 = vmatprep.mubr.bf16.mxu0 %v234
    %715 = vmatmul.mubr.bf16.gmra.mrb[0].mxu0 %v233
    %v716 = vpop.f32.mrb[0].mxu0
    %v717 = vadd.f32 %v312, %v716
    %v718 = vpop.f32.mrb[0].mxu0
    %v719 = vadd.f32 %v316, %v718
    %v720 = vpop.f32.mrb[0].mxu0
    %v721 = vpop.f32.mrb[0].mxu0
    %722 = vdwg.mxu0
    %v723 = vmax.f32 %v676, 0.0
    %v724 = vmax.f32 %v678, 0.0
    %v725 = vmax.f32 %v717, 0.0
    %v726 = vmax.f32 %v719, 0.0
    %v727 = vpack.c.bf16 %v723, %v723
    %v728 = vpack.c.bf16 %v724, %v724
    %v729 = vpack.c.bf16 %v725, %v725
    %v730 = vpack.c.bf16 %v726, %v726
    %v731 = vld [vmem:[#allocation8] sm:$0xf]
    %v732 = vld [vmem:[#allocation8 + $0x4] sm:$0xf]
    %v733 = vld [vmem:[#allocation8 + $0x8] sm:$0xf]
    %v734 = vld [vmem:[#allocation8 + $0xc] sm:$0xf]
    %v735 = vld [vmem:[#allocation8 + $0x10] sm:$0xf]
    %v736 = vld [vmem:[#allocation8 + $0x14] sm:$0xf]
    %v737 = vld [vmem:[#allocation8 + $0x18] sm:$0xf]
    %v738 = vld [vmem:[#allocation8 + $0x1c] sm:$0xf]
    %v739 = vld [vmem:[#allocation8 + $0x20] sm:$0xf]
    %v740 = vld [vmem:[#allocation8 + $0x24] sm:$0xf]
    %v741 = vld [vmem:[#allocation8 + $0x28] sm:$0xf]
    %v742 = vld [vmem:[#allocation8 + $0x2c] sm:$0xf]
    %v743 = vld [vmem:[#allocation8 + $0x30] sm:$0xf]
    %v744 = vld [vmem:[#allocation8 + $0x34] sm:$0xf]
    %v745 = vld [vmem:[#allocation8 + $0x38] sm:$0xf]
    %v746 = vld [vmem:[#allocation8 + $0x3c] sm:$0xf]
    %v747 = vld [vmem:[#allocation8 + $0x40] sm:$0xf]
    %v748 = vld [vmem:[#allocation8 + $0x44] sm:$0xf]
    %v749 = vld [vmem:[#allocation8 + $0x48] sm:$0xf]
    %v750 = vld [vmem:[#allocation8 + $0x4c] sm:$0xf]
    %v751 = vld [vmem:[#allocation8 + $0x50] sm:$0xf]
    %v752 = vld [vmem:[#allocation8 + $0x54] sm:$0xf]
    %v753 = vld [vmem:[#allocation8 + $0x58] sm:$0xf]
    %v754 = vld [vmem:[#allocation8 + $0x5c] sm:$0xf]
    %v755 = vld [vmem:[#allocation8 + $0x60] sm:$0xf]
    %v756 = vld [vmem:[#allocation8 + $0x64] sm:$0xf]
    %v757 = vld [vmem:[#allocation8 + $0x68] sm:$0xf]
    %v758 = vld [vmem:[#allocation8 + $0x6c] sm:$0xf]
    %v759 = vld [vmem:[#allocation8 + $0x70] sm:$0xf]
    %v760 = vld [vmem:[#allocation8 + $0x74] sm:$0xf]
    %v761 = vld [vmem:[#allocation8 + $0x78] sm:$0xf]
    %v762 = vld [vmem:[#allocation8 + $0x7c] sm:$0xf]
    %v763 = vld [vmem:[#allocation8 + $0x80] sm:$0xf]
    %v764 = vld [vmem:[#allocation8 + $0x84] sm:$0xf]
    %v765 = vld [vmem:[#allocation8 + $0x88] sm:$0xf]
    %v766 = vld [vmem:[#allocation8 + $0x8c] sm:$0xf]
    %v767 = vld [vmem:[#allocation8 + $0x90] sm:$0xf]
    %v768 = vld [vmem:[#allocation8 + $0x94] sm:$0xf]
    %v769 = vld [vmem:[#allocation8 + $0x98] sm:$0xf]
    %v770 = vld [vmem:[#allocation8 + $0x9c] sm:$0xf]
    %v771 = vld [vmem:[#allocation8 + $0xa0] sm:$0xf]
    %v772 = vld [vmem:[#allocation8 + $0xa4] sm:$0xf]
    %v773 = vld [vmem:[#allocation8 + $0xa8] sm:$0xf]
    %v774 = vld [vmem:[#allocation8 + $0xac] sm:$0xf]
    %v775 = vld [vmem:[#allocation8 + $0xb0] sm:$0xf]
    %v776 = vld [vmem:[#allocation8 + $0xb4] sm:$0xf]
    %v777 = vld [vmem:[#allocation8 + $0xb8] sm:$0xf]
    %v778 = vld [vmem:[#allocation8 + $0xbc] sm:$0xf]
    %v779 = vld [vmem:[#allocation8 + $0xc0] sm:$0xf]
    %v780 = vld [vmem:[#allocation8 + $0xc4] sm:$0xf]
    %v781 = vld [vmem:[#allocation8 + $0xc8] sm:$0xf]
    %v782 = vld [vmem:[#allocation8 + $0xcc] sm:$0xf]
    %v783 = vld [vmem:[#allocation8 + $0xd0] sm:$0xf]
    %v784 = vld [vmem:[#allocation8 + $0xd4] sm:$0xf]
    %v785 = vld [vmem:[#allocation8 + $0xd8] sm:$0xf]
    %v786 = vld [vmem:[#allocation8 + $0xdc] sm:$0xf]
    %v787 = vld [vmem:[#allocation8 + $0xe0] sm:$0xf]
    %v788 = vld [vmem:[#allocation8 + $0xe4] sm:$0xf]
    %v789 = vld [vmem:[#allocation8 + $0xe8] sm:$0xf]
    %v790 = vld [vmem:[#allocation8 + $0xec] sm:$0xf]
    %v791 = vld [vmem:[#allocation8 + $0xf0] sm:$0xf]
    %v792 = vld [vmem:[#allocation8 + $0xf4] sm:$0xf]
    %v793 = vld [vmem:[#allocation8 + $0xf8] sm:$0xf]
    %v794 = vld [vmem:[#allocation8 + $0xfc] sm:$0xf]
    %v795 = vld [vmem:[%s6] sm:$0x1]
    %v797 = vlaneseq
    %v798 = vshrl.u32 %v797, 7
    %v799 = vsub.s32 0, %v798
    %v800 = vrot.slane %v795, %v799
    %v866 = vunpack.c.l.b16 %v731
    %v867 = vunpack.c.l.b16 %v732
    %v868 = vunpack.c.l.b16 %v733
    %v869 = vunpack.c.l.b16 %v734
    %v870 = vunpack.c.l.b16 %v735
    %v871 = vunpack.c.l.b16 %v736
    %v872 = vunpack.c.l.b16 %v737
    %v873 = vunpack.c.l.b16 %v738
    %v874 = vunpack.c.l.b16 %v739
    %v875 = vunpack.c.l.b16 %v740
    %v876 = vunpack.c.l.b16 %v741
    %v877 = vunpack.c.l.b16 %v742
    %v878 = vunpack.c.l.b16 %v743
    %v879 = vunpack.c.l.b16 %v744
    %v880 = vunpack.c.l.b16 %v745
    %v881 = vunpack.c.l.b16 %v746
    %v882 = vunpack.c.l.b16 %v747
    %v883 = vunpack.c.l.b16 %v748
    %v884 = vunpack.c.l.b16 %v749
    %v885 = vunpack.c.l.b16 %v750
    %v886 = vunpack.c.l.b16 %v751
    %v887 = vunpack.c.l.b16 %v752
    %v888 = vunpack.c.l.b16 %v753
    %v889 = vunpack.c.l.b16 %v754
    %v890 = vunpack.c.l.b16 %v755
    %v891 = vunpack.c.l.b16 %v756
    %v892 = vunpack.c.l.b16 %v757
    %v893 = vunpack.c.l.b16 %v758
    %v894 = vunpack.c.l.b16 %v759
    %v895 = vunpack.c.l.b16 %v760
    %v896 = vunpack.c.l.b16 %v761
    %v897 = vunpack.c.l.b16 %v762
    %v898 = vunpack.c.l.b16 %v763
    %v899 = vunpack.c.l.b16 %v764
    %v900 = vunpack.c.l.b16 %v765
    %v901 = vunpack.c.l.b16 %v766
    %v902 = vunpack.c.l.b16 %v767
    %v903 = vunpack.c.l.b16 %v768
    %v904 = vunpack.c.l.b16 %v769
    %v905 = vunpack.c.l.b16 %v770
    %v906 = vunpack.c.l.b16 %v771
    %v907 = vunpack.c.l.b16 %v772
    %v908 = vunpack.c.l.b16 %v773
    %v909 = vunpack.c.l.b16 %v774
    %v910 = vunpack.c.l.b16 %v775
    %v911 = vunpack.c.l.b16 %v776
    %v912 = vunpack.c.l.b16 %v777
    %v913 = vunpack.c.l.b16 %v778
    %v914 = vunpack.c.l.b16 %v779
    %v915 = vunpack.c.l.b16 %v780
    %v916 = vunpack.c.l.b16 %v781
    %v917 = vunpack.c.l.b16 %v782
    %v918 = vunpack.c.l.b16 %v783
    %v919 = vunpack.c.l.b16 %v784
    %v920 = vunpack.c.l.b16 %v785
    %v921 = vunpack.c.l.b16 %v786
    %v922 = vunpack.c.l.b16 %v787
    %v923 = vunpack.c.l.b16 %v788
    %v924 = vunpack.c.l.b16 %v789
    %v925 = vunpack.c.l.b16 %v790
    %v926 = vunpack.c.l.b16 %v791
    %v927 = vunpack.c.l.b16 %v792
    %v928 = vunpack.c.l.b16 %v793
    %v929 = vunpack.c.l.b16 %v794
    %v930 = vpack.c.b16 %v867, %v866
    %v931 = vpack.c.b16 %v869, %v868
    %v932 = vpack.c.b16 %v871, %v870
    %v933 = vpack.c.b16 %v873, %v872
    %v934 = vpack.c.b16 %v875, %v874
    %v935 = vpack.c.b16 %v877, %v876
    %v936 = vpack.c.b16 %v879, %v878
    %v937 = vpack.c.b16 %v881, %v880
    %v938 = vpack.c.b16 %v883, %v882
    %v939 = vpack.c.b16 %v885, %v884
    %v940 = vpack.c.b16 %v887, %v886
    %v941 = vpack.c.b16 %v889, %v888
    %v942 = vpack.c.b16 %v891, %v890
    %v943 = vpack.c.b16 %v893, %v892
    %v944 = vpack.c.b16 %v895, %v894
    %v945 = vpack.c.b16 %v897, %v896
    %v946 = vpack.c.b16 %v899, %v898
    %v947 = vpack.c.b16 %v901, %v900
    %v948 = vpack.c.b16 %v903, %v902
    %v949 = vpack.c.b16 %v905, %v904
    %v950 = vpack.c.b16 %v907, %v906
    %v951 = vpack.c.b16 %v909, %v908
    %v952 = vpack.c.b16 %v911, %v910
    %v953 = vpack.c.b16 %v913, %v912
    %v954 = vpack.c.b16 %v915, %v914
    %v955 = vpack.c.b16 %v917, %v916
    %v956 = vpack.c.b16 %v919, %v918
    %v957 = vpack.c.b16 %v921, %v920
    %v958 = vpack.c.b16 %v923, %v922
    %v959 = vpack.c.b16 %v925, %v924
    %v960 = vpack.c.b16 %v927, %v926
    %v961 = vpack.c.b16 %v929, %v928
    %994 = vmatprep.subr.bf16.mxu0 0
    %995 = vmatpush1.bf16.msra.mxu0 %v930
    %996 = vmatprep.subr.bf16.mxu0 0
    %997 = vmatpush1.bf16.msra.mxu0 %v931
    %998 = vmatprep.subr.bf16.mxu0 0
    %999 = vmatpush1.bf16.msra.mxu0 %v932
    %1000 = vmatprep.subr.bf16.mxu0 0
    %1001 = vmatpush1.bf16.msra.mxu0 %v933
    %1002 = vmatprep.subr.bf16.mxu0 0
    %1003 = vmatpush1.bf16.msra.mxu0 %v934
    %1004 = vmatprep.subr.bf16.mxu0 0
    %1005 = vmatpush1.bf16.msra.mxu0 %v935
    %1006 = vmatprep.subr.bf16.mxu0 0
    %1007 = vmatpush1.bf16.msra.mxu0 %v936
    %1008 = vmatprep.subr.bf16.mxu0 0
    %1009 = vmatpush1.bf16.msra.mxu0 %v937
    %1010 = vmatprep.subr.bf16.mxu0 0
    %1011 = vmatpush1.bf16.msra.mxu0 %v938
    %1012 = vmatprep.subr.bf16.mxu0 0
    %1013 = vmatpush1.bf16.msra.mxu0 %v939
    %1014 = vmatprep.subr.bf16.mxu0 0
    %1015 = vmatpush1.bf16.msra.mxu0 %v940
    %1016 = vmatprep.subr.bf16.mxu0 0
    %1017 = vmatpush1.bf16.msra.mxu0 %v941
    %1018 = vmatprep.subr.bf16.mxu0 0
    %1019 = vmatpush1.bf16.msra.mxu0 %v942
    %1020 = vmatprep.subr.bf16.mxu0 0
    %1021 = vmatpush1.bf16.msra.mxu0 %v943
    %1022 = vmatprep.subr.bf16.mxu0 0
    %1023 = vmatpush1.bf16.msra.mxu0 %v944
    %1024 = vmatprep.subr.bf16.mxu0 0
    %1025 = vmatpush1.bf16.msra.mxu0 %v945
    %1026 = vmatprep.mubr.bf16.mxu0 %v728
    %1027 = vmatmul.mubr.bf16.gmra.mrb[0].mxu0 %v727
    %v1028 = vpop.f32.mrb[0].mxu0
    %v1029 = vadd.f32 %v800, %v1028
    %v1030 = vpop.f32.mrb[0].mxu0
    %v1031 = vpop.f32.mrb[0].mxu0
    %v1032 = vpop.f32.mrb[0].mxu0
    %1033 = vdwg.mxu0
    %1034 = vmatprep.subr.bf16.mxu0 0
    %1035 = vmatpush1.bf16.msra.mxu0 %v946
    %1036 = vmatprep.subr.bf16.mxu0 0
    %1037 = vmatpush1.bf16.msra.mxu0 %v947
    %1038 = vmatprep.subr.bf16.mxu0 0
    %1039 = vmatpush1.bf16.msra.mxu0 %v948
    %1040 = vmatprep.subr.bf16.mxu0 0
    %1041 = vmatpush1.bf16.msra.mxu0 %v949
    %1042 = vmatprep.subr.bf16.mxu0 0
    %1043 = vmatpush1.bf16.msra.mxu0 %v950
    %1044 = vmatprep.subr.bf16.mxu0 0
    %1045 = vmatpush1.bf16.msra.mxu0 %v951
    %1046 = vmatprep.subr.bf16.mxu0 0
    %1047 = vmatpush1.bf16.msra.mxu0 %v952
    %1048 = vmatprep.subr.bf16.mxu0 0
    %1049 = vmatpush1.bf16.msra.mxu0 %v953
    %1050 = vmatprep.subr.bf16.mxu0 0
    %1051 = vmatpush1.bf16.msra.mxu0 %v954
    %1052 = vmatprep.subr.bf16.mxu0 0
    %1053 = vmatpush1.bf16.msra.mxu0 %v955
    %1054 = vmatprep.subr.bf16.mxu0 0
    %1055 = vmatpush1.bf16.msra.mxu0 %v956
    %1056 = vmatprep.subr.bf16.mxu0 0
    %1057 = vmatpush1.bf16.msra.mxu0 %v957
    %1058 = vmatprep.subr.bf16.mxu0 0
    %1059 = vmatpush1.bf16.msra.mxu0 %v958
    %1060 = vmatprep.subr.bf16.mxu0 0
    %1061 = vmatpush1.bf16.msra.mxu0 %v959
    %1062 = vmatprep.subr.bf16.mxu0 0
    %1063 = vmatpush1.bf16.msra.mxu0 %v960
    %1064 = vmatprep.subr.bf16.mxu0 0
    %1065 = vmatpush1.bf16.msra.mxu0 %v961
    %1066 = vmatprep.mubr.bf16.mxu0 %v730
    %1067 = vmatmul.mubr.bf16.gmra.mrb[0].mxu0 %v729
    %v1068 = vpop.f32.mrb[0].mxu0
    %v1069 = vadd.f32 %v1029, %v1068
    %v1070 = vpop.f32.mrb[0].mxu0
    %v1071 = vpop.f32.mrb[0].mxu0
    %v1072 = vpop.f32.mrb[0].mxu0
    %1073 = vdwg.mxu0
    %v1074 = vmax.f32 %v1069, 0.0
    %1075 = vst [vmem:[#allocation10] sm:$0xff] %v1074
    // Predicated region
    $region46: #{tpu_custom_call.1} parent=1 // pred_check
      _
    $region47: #{tpu_custom_call.1} parent=1 // pred_check_branch
      %1077 = sbr.rel (0) target = $region49
    $region48: #{tpu_custom_call.1} parent=1 // pred_region
      %s1079 = ssub.s32 128, 128
      %1080 = vsyncadd [#allocation4], %s1079
      %s1082 = sshll.u32 [#allocation10], 4
      %s1083 = int_to_ptr.vmem [resolvable:$true] %s1082
      %1085 = dma.vmem_to_hbm [thread:$0]  %s1083, 128, %s7, [#allocation4]
    $region49: #{tpu_custom_call.1} parent=1 // pred_fallthru
      _
    // Predicated region
    $region50: #{tpu_custom_call.1} parent=1 // pred_check
      _
    $region51: #{tpu_custom_call.1} parent=1 // pred_check_branch
      %1087 = sbr.rel (0) target = $region53
    $region52: #{tpu_custom_call.1} parent=1 // pred_region
      %1088 = dma.done [#allocation4], 128
    $region53: #{tpu_custom_call.1} parent=1 // pred_fallthru
      _
    %1089 = vsyncpa [#allocation3], 1
    %1090 = vsyncpa [#allocation6], 1
    %1091 = vsyncpa [#allocation9], 1
    %1092 = vsyncpa [#allocation4], 1

</llo_original>
